<compile_context>
chip_gen: v7x
topology: tpu7x:2x2x1
jax: 0.10.0
libtpu: 0.0.40
codegen_flags: <defaults>
</compile_context>

<pallas_src>
import functools

import jax
import jax.numpy as jnp
from jax.experimental import pallas as pl
from jax.experimental.pallas import tpu as pltpu


# Tanh-approx GELU runs on the EUP (its own VLIW slot, concurrent with VALU/MXU);
# exact-erf GELU is a long VALU polynomial that can make the FFN-up epilogue
# VALU-slot-bound on v6e/v7x.  Set False for bit-parity with HF's exact GELU.
GELU_APPROXIMATE = True


# ----------------------------- budget / tiling ------------------------------

def _vmem_limit():
    """Scoped-VMEM budget for one pallas_call, queried at trace time."""
    try:
        cap = pltpu.get_tpu_info().vmem_capacity_bytes   # 128 MiB v5e/v6e, 64 MiB v7x
    except Exception:
        cap = 64 * 1024 * 1024                           # conservative fallback
    return int(min((cap * 3) // 4, 96 * 1024 * 1024))


def _tile(dim, target, align):
    """Largest multiple of `align` that divides `dim` and is <= target; else full dim."""
    if dim <= target:
        return dim
    t = (target // align) * align
    while t >= align:
        if dim % t == 0:
            return t
        t -= align
    return dim


_TM_CAND = (2048, 1024, 512, 256, 128, 64, 32, 16, 8)
_TNK_CAND = (4096, 3072, 2048, 1536, 1024, 768, 512, 256, 128)


def _desc(dim, cands):
    return [dim] + [c for c in cands if c < dim]


def _pick_linear_tiles(M, N, K, budget):
    """(tm, tn, tk) for the K-accumulating matmul.

    Preference: keep K and N whole (weights fetched once, x not re-streamed per j),
    then the largest tm that fits the VMEM budget with headroom.
    """
    usable = int(budget * 0.85)

    def fits(tm, tn, tk):
        need = (2 * tm * tk * 2      # x  (bf16, double-buffered)
                + 2 * tk * tn * 2    # w  (bf16, double-buffered)
                + 2 * tm * tn * 2    # out (bf16, double-buffered)
                + tm * tn * 4)       # f32 accumulator scratch
        return need <= usable

    for tk_t in _desc(K, _TNK_CAND):
        tk = _tile(K, tk_t, 128)
        for tn_t in _desc(N, _TNK_CAND):
            tn = _tile(N, tn_t, 128)
            for tm_t in _TM_CAND:
                tm = _tile(M, tm_t, 8)
                if fits(tm, tn, tk):
                    return tm, tn, tk
    return _tile(M, 128, 8), _tile(N, 256, 128), _tile(K, 256, 128)


def _pick_fused_ln_tiles(M, N, K, budget):
    """(tm, tk) for the fused matmul+residual+LayerNorm kernel (N always whole)."""
    usable = int(budget * 0.85)

    def fits(tm, tk):
        need = (2 * tm * tk * 2      # x
                + 2 * tk * N * 2     # w
                + 2 * tm * N * 2     # residual
                + 2 * tm * N * 2     # out
                + tm * N * 4)        # f32 accumulator
        return need <= usable

    for tk_t in _desc(K, _TNK_CAND):
        tk = _tile(K, tk_t, 128)
        for tm_t in _TM_CAND:
            tm = _tile(M, tm_t, 8)
            if fits(tm, tk):
                return tm, tk
    return _tile(M, 128, 8), _tile(K, 256, 128)


# ----------------------------- Pallas kernels ------------------------------

def _matmul_kernel(x_ref, w_ref, b_ref, o_ref, acc_ref, *, activation):
    k = pl.program_id(2)

    @pl.when(k == 0)
    def _():
        acc_ref[...] = jnp.zeros_like(acc_ref)

    acc_ref[...] += jnp.dot(x_ref[...], w_ref[...],
                            preferred_element_type=jnp.float32)

    @pl.when(k == pl.num_programs(2) - 1)
    def _():
        y = acc_ref[...] + b_ref[...].astype(jnp.float32)
        if activation == "gelu":
            y = jax.nn.gelu(y, approximate=GELU_APPROXIMATE)
        o_ref[...] = y.astype(o_ref.dtype)


def linear(x, w, b, activation=None):
    """x: (M, K) @ w: (K, N) + b, optional GELU.  Tiled (M, N, K) grid, f32 acc."""
    M, K = x.shape
    N = w.shape[1]
    limit = _vmem_limit()
    tm, tn, tk = _pick_linear_tiles(M, N, K, limit)
    grid = (M // tm, N // tn, K // tk)
    # Note: with tn == N and tk == K the weight block index is constant over the
    # whole grid, so the weight is DMA'd once and stays resident -- no need for
    # deeper pipeline_mode buffering on the weight spec.
    return pl.pallas_call(
        functools.partial(_matmul_kernel, activation=activation),
        out_shape=jax.ShapeDtypeStruct((M, N), x.dtype),
        grid_spec=pltpu.PrefetchScalarGridSpec(
            num_scalar_prefetch=0,
            grid=grid,
            in_specs=[
                pl.BlockSpec((tm, tk), lambda i, j, k: (i, k)),
                pl.BlockSpec((tk, tn), lambda i, j, k: (k, j)),
                pl.BlockSpec((1, tn), lambda i, j, k: (0, j)),
            ],
            out_specs=pl.BlockSpec((tm, tn), lambda i, j, k: (i, j)),
            scratch_shapes=[pltpu.VMEM((tm, tn), jnp.float32)],
        ),
        compiler_params=pltpu.CompilerParams(
            dimension_semantics=("parallel", "parallel", "arbitrary"),
            vmem_limit_bytes=limit),
    )(x, w, b.reshape(1, N))


def _matmul_res_ln_kernel(x_ref, w_ref, b_ref, r_ref, g_ref, bb_ref,
                          o_ref, acc_ref, *, eps):
    """LN(residual + x @ w + b): K-tiled accumulation, LN epilogue on last K step."""
    k = pl.program_id(1)

    @pl.when(k == 0)
    def _():
        acc_ref[...] = jnp.zeros_like(acc_ref)

    acc_ref[...] += jnp.dot(x_ref[...], w_ref[...],
                            preferred_element_type=jnp.float32)

    @pl.when(k == pl.num_programs(1) - 1)
    def _():
        h = (acc_ref[...] + b_ref[...].astype(jnp.float32)
             + r_ref[...].astype(jnp.float32))
        mu = jnp.mean(h, axis=-1, keepdims=True)
        var = jnp.mean((h - mu) ** 2, axis=-1, keepdims=True)
        nh = (h - mu) * jax.lax.rsqrt(var + eps)
        o_ref[...] = (nh * g_ref[...].astype(jnp.float32)
                      + bb_ref[...].astype(jnp.float32)).astype(o_ref.dtype)


def linear_residual_layernorm(x, w, b, residual, gamma, beta, eps=1e-12):
    """Fused (x @ w + b) + residual, then LayerNorm over the last axis."""
    M, K = x.shape
    N = w.shape[1]
    limit = _vmem_limit()
    tm, tk = _pick_fused_ln_tiles(M, N, K, limit)
    grid = (M // tm, K // tk)
    return pl.pallas_call(
        functools.partial(_matmul_res_ln_kernel, eps=eps),
        out_shape=jax.ShapeDtypeStruct((M, N), residual.dtype),
        grid_spec=pltpu.PrefetchScalarGridSpec(
            num_scalar_prefetch=0,
            grid=grid,
            in_specs=[
                pl.BlockSpec((tm, tk), lambda i, k: (i, k)),
                pl.BlockSpec((tk, N), lambda i, k: (k, 0)),
                pl.BlockSpec((1, N), lambda i, k: (0, 0)),
                pl.BlockSpec((tm, N), lambda i, k: (i, 0)),
                pl.BlockSpec((1, N), lambda i, k: (0, 0)),
                pl.BlockSpec((1, N), lambda i, k: (0, 0)),
            ],
            out_specs=pl.BlockSpec((tm, N), lambda i, k: (i, 0)),
            scratch_shapes=[pltpu.VMEM((tm, N), jnp.float32)],
        ),
        compiler_params=pltpu.CompilerParams(
            dimension_semantics=("parallel", "arbitrary"),
            vmem_limit_bytes=limit),
    )(x, w, b.reshape(1, N), residual, gamma.reshape(1, N), beta.reshape(1, N))


def _layernorm_kernel(x_ref, g_ref, b_ref, o_ref, *, eps):
    h = x_ref[...].astype(jnp.float32)
    mu = jnp.mean(h, axis=-1, keepdims=True)
    var = jnp.mean((h - mu) ** 2, axis=-1, keepdims=True)
    nh = (h - mu) * jax.lax.rsqrt(var + eps)
    o_ref[...] = (nh * g_ref[...].astype(jnp.float32)
                  + b_ref[...].astype(jnp.float32)).astype(o_ref.dtype)


def layernorm(x, gamma, beta, eps=1e-12):
    """Single-input LayerNorm over the last axis, row-tiled (no zero-slab residual)."""
    M, H = x.shape
    limit = _vmem_limit()
    usable = int(limit * 0.85)
    tm = _tile(M, 8, 8)
    for tm_t in _TM_CAND:                       # 2048 preferred; budget-checked
        tm = _tile(M, tm_t, 8)
        if 8 * tm * H <= usable:                # 2x in + 2x out bf16 blocks
            break
    return pl.pallas_call(
        functools.partial(_layernorm_kernel, eps=eps),
        out_shape=jax.ShapeDtypeStruct((M, H), x.dtype),
        grid_spec=pltpu.PrefetchScalarGridSpec(
            num_scalar_prefetch=0,
            grid=(M // tm,),
            in_specs=[
                pl.BlockSpec((tm, H), lambda i: (i, 0)),
                pl.BlockSpec((1, H), lambda i: (0, 0)),
                pl.BlockSpec((1, H), lambda i: (0, 0)),
            ],
            out_specs=pl.BlockSpec((tm, H), lambda i: (i, 0)),
        ),
        compiler_params=pltpu.CompilerParams(
            dimension_semantics=("parallel",),
            vmem_limit_bytes=limit),
    )(x, gamma.reshape(1, H), beta.reshape(1, H))


def _attention_kernel(qkv_ref, bias_ref, o_ref, ctx_ref, *, heads, head_dim, scale):
    """All heads of one batch element per grid step; lane-dense (S, H) output store."""
    H = heads * head_dim
    qkv = qkv_ref[0]                                 # (S, 3H) bf16
    bias = bias_ref[...].astype(jnp.float32)         # (1, S), broadcast over query rows
    # TODO(synk): per-head q/k/v column slices are head_dim (<128) lanes wide; a fully
    # lane-aligned access would need the QKV projection emitted in a head-blocked
    # (B, 3, heads, S, head_dim) layout (extra transpose pass) -- not done here.
    for h in range(heads):
        lo = h * head_dim
        q = qkv[:, lo:lo + head_dim]                 # (S, D)
        k = qkv[:, H + lo:H + lo + head_dim]         # (S, D)
        v = qkv[:, 2 * H + lo:2 * H + lo + head_dim]  # (S, D)
        # Contract the head_dim axes directly on the MXU -- no k.T transpose.
        s = jax.lax.dot_general(q, k, (((1,), (1,)), ((), ())),
                                preferred_element_type=jnp.float32)
        s = s * scale + bias
        m = jnp.max(s, axis=-1, keepdims=True)
        p = jnp.exp(s - m)
        denom = jnp.sum(p, axis=-1, keepdims=True)
        p = p * pl.reciprocal(denom, approx=True)
        # Write this head's context into the f32 VMEM scratch (bounds live ranges);
        # a single lane-dense (S, H) store to o_ref happens at the end.
        ctx_ref[:, lo:lo + head_dim] = jnp.dot(p.astype(v.dtype), v,
                                               preferred_element_type=jnp.float32)
    o_ref[0] = ctx_ref[...].astype(o_ref.dtype)


def attention(qkv, mask_bias, *, heads):
    """qkv: (B, S, 3H) packed [q|k|v]; mask_bias: (B, S) additive key bias -> (B, S, H)."""
    B, S, H3 = qkv.shape
    H = H3 // 3
    head_dim = H // heads
    scale = 1.0 / (head_dim ** 0.5)
    limit = _vmem_limit()
    # grid=(B,) marked "parallel": megacore shards batch elements across the two
    # v7x TensorCores (B should be even and >= 2 for full utilization).
    return pl.pallas_call(
        functools.partial(_attention_kernel, heads=heads, head_dim=head_dim,
                          scale=scale),
        out_shape=jax.ShapeDtypeStruct((B, S, H), qkv.dtype),
        grid_spec=pltpu.PrefetchScalarGridSpec(
            num_scalar_prefetch=0,
            grid=(B,),
            in_specs=[
                pl.BlockSpec((1, S, H3), lambda b: (b, 0, 0)),
                pl.BlockSpec((1, S), lambda b: (b, 0)),
            ],
            out_specs=pl.BlockSpec((1, S, H), lambda b: (b, 0, 0)),
            scratch_shapes=[pltpu.VMEM((S, H), jnp.float32)],
        ),
        compiler_params=pltpu.CompilerParams(
            dimension_semantics=("parallel",),
            vmem_limit_bytes=limit),
    )(qkv, mask_bias)


# ----------------------------- model (glue + kernels) -----------------------

def init_params(key, *, vocab, hidden, layers, heads, intermediate,
                max_pos, type_vocab, label_nbr, dtype=jnp.bfloat16):
    def nrm(k, shape):
        return (0.02 * jax.random.normal(k, shape)).astype(dtype)

    keys = iter(jax.random.split(key, 8 + layers * 8))
    p = {
        "word_emb": nrm(next(keys), (vocab, hidden)),
        "pos_emb": nrm(next(keys), (max_pos, hidden)),
        "type_emb": nrm(next(keys), (type_vocab, hidden)),
        "emb_ln_g": jnp.ones((hidden,), dtype),
        "emb_ln_b": jnp.zeros((hidden,), dtype),
        "cls_w": nrm(next(keys), (hidden, label_nbr)),
        "cls_b": jnp.zeros((label_nbr,), dtype),
        "layers": [],
    }
    for _ in range(layers):
        lp = {
            # fused QKV projection: [H, 3H] weight ([Wq|Wk|Wv] columns), [3H] bias
            "w_qkv": nrm(next(keys), (hidden, 3 * hidden)),
            "b_qkv": jnp.zeros((3 * hidden,), dtype),
            "wo": nrm(next(keys), (hidden, hidden)), "bo": jnp.zeros((hidden,), dtype),
            "ln1_g": jnp.ones((hidden,), dtype), "ln1_b": jnp.zeros((hidden,), dtype),
            "w1": nrm(next(keys), (hidden, intermediate)),
            "b1": jnp.zeros((intermediate,), dtype),
            "w2": nrm(next(keys), (intermediate, hidden)),
            "b2": jnp.zeros((hidden,), dtype),
            "ln2_g": jnp.ones((hidden,), dtype), "ln2_b": jnp.zeros((hidden,), dtype),
        }
        p["layers"].append(lp)
    return p


def koelectra_forward(params, input_ids, attention_mask, token_type_ids, *, heads):
    B, S = input_ids.shape
    hidden = params["word_emb"].shape[1]

    # Embedding gather (glue in XLA; sparse gather has no dense Pallas hot path here).
    positions = jnp.arange(S, dtype=jnp.int32)
    emb = (jnp.take(params["word_emb"], input_ids, axis=0)
           + jnp.take(params["pos_emb"], positions, axis=0)[None, :, :]
           + jnp.take(params["type_emb"], token_type_ids, axis=0))     # (B, S, H)

    x2d = emb.reshape(B * S, hidden)
    x2d = layernorm(x2d, params["emb_ln_g"], params["emb_ln_b"])
    # TODO(synk): dropout layers are identity (inference semantics), no RNG applied.

    mask_bias = ((1.0 - attention_mask.astype(jnp.float32)) * -10000.0)  # (B, S) f32

    for lp in params["layers"]:
        # --- self-attention: fused QKV projection (single HBM read of x2d) ---
        qkv2d = linear(x2d, lp["w_qkv"], lp["b_qkv"])            # (B*S, 3H)
        qkv = qkv2d.reshape(B, S, 3 * hidden)                    # free reshape
        ctx = attention(qkv, mask_bias, heads=heads)             # (B, S, H), lane-dense
        ctx2d = ctx.reshape(B * S, hidden)

        # --- out-proj + residual + LN1 (fused) ---
        x2d = linear_residual_layernorm(ctx2d, lp["wo"], lp["bo"], x2d,
                                        lp["ln1_g"], lp["ln1_b"])

        # --- feed-forward: GELU matmul, then w2 + residual + LN2 (fused) ---
        h = linear(x2d, lp["w1"], lp["b1"], activation="gelu")
        x2d = linear_residual_layernorm(h, lp["w2"], lp["b2"], x2d,
                                        lp["ln2_g"], lp["ln2_b"])

    x = x2d.reshape(B, S, hidden)
    cls = x[:, 0, :]                                             # == [0][:, 0, :]
    # Classifier head stays in XLA: num_labels << 128 output lanes makes a Pallas
    # launch pure overhead (masked vst + DMA setup for negligible FLOPs).
    logits = (jnp.dot(cls, params["cls_w"], preferred_element_type=jnp.float32)
              + params["cls_b"].astype(jnp.float32))
    return logits


# ---------------------------------- main ------------------------------------

if __name__ == "__main__":
    # Small synthetic config consistent with the module's forward.
    VOCAB = 100          # tokenizer_len
    HIDDEN = 32
    LAYERS = 2
    HEADS = 4
    INTERMEDIATE = 64
    MAX_POS = 16
    TYPE_VOCAB = 2
    LABEL_NBR = 3
    B, S = 2, 8

    root = jax.random.PRNGKey(0)
    k_param, k_ids, k_types = jax.random.split(root, 3)

    params = init_params(
        k_param, vocab=VOCAB, hidden=HIDDEN, layers=LAYERS, heads=HEADS,
        intermediate=INTERMEDIATE, max_pos=MAX_POS, type_vocab=TYPE_VOCAB,
        label_nbr=LABEL_NBR)

    input_ids = jax.random.randint(k_ids, (B, S), 0, VOCAB, dtype=jnp.int32)
    token_type_ids = jax.random.randint(k_types, (B, S), 0, TYPE_VOCAB, dtype=jnp.int32)
    attention_mask = jnp.ones((B, S), jnp.int32).at[1, 6:].set(0)   # pad tail of batch 1

    logits = koelectra_forward(params, input_ids, attention_mask, token_type_ids,
                               heads=HEADS)
    jax.block_until_ready(logits)
    assert logits.shape == (B, LABEL_NBR)
    assert bool(jnp.all(jnp.isfinite(logits)))
    print("KERNEL_OK")
</pallas_src>

<mosaic_0001>
module attributes {stable_mosaic.version = 11 : i64} {
  func.func @_layernorm_kernel(%arg0: i32, %arg1: memref<16x32xbf16, #tpu.memory_space<vmem>>, %arg2: memref<1x32xbf16, #tpu.memory_space<vmem>>, %arg3: memref<1x32xbf16, #tpu.memory_space<vmem>>, %arg4: memref<16x32xbf16, #tpu.memory_space<vmem>>) attributes {dimension_semantics = [#tpu.dimension_semantics<parallel>], iteration_bounds = array<i64: 1>, scalar_prefetch = 0 : i64, scratch_operands = 0 : i64, tpu.core_type = #tpu.core_type<tc>, window_params = [{transform_indices = @transform_0, window_bounds = array<i64: 16, 32>}, {pipeline_mode = #tpu.pipeline_mode<synchronous>, transform_indices = @transform_1, window_bounds = array<i64: 1, 32>}, {pipeline_mode = #tpu.pipeline_mode<synchronous>, transform_indices = @transform_2, window_bounds = array<i64: 1, 32>}, {transform_indices = @transform_3, window_bounds = array<i64: 16, 32>}]} {
    %c0 = arith.constant 0 : index
    %c0_0 = arith.constant 0 : index
    %0 = vector.load %arg1[%c0, %c0_0] : memref<16x32xbf16, #tpu.memory_space<vmem>>, vector<16x32xbf16>
    %1 = arith.extf %0 : vector<16x32xbf16> to vector<16x32xf32>
    %cst = arith.constant dense<0.000000e+00> : vector<16xf32>
    %2 = vector.multi_reduction <add>, %1, %cst [1] : vector<16x32xf32> to vector<16xf32>
    %3 = vector.shape_cast %2 : vector<16xf32> to vector<16x1xf32>
    %cst_1 = arith.constant 3.200000e+01 : f32
    %4 = vector.broadcast %cst_1 : f32 to vector<16x1xf32>
    %5 = arith.divf %3, %4 : vector<16x1xf32>
    %6 = vector.broadcast %5 : vector<16x1xf32> to vector<16x32xf32>
    %7 = arith.subf %1, %6 : vector<16x32xf32>
    %8 = arith.mulf %7, %7 : vector<16x32xf32>
    %cst_2 = arith.constant dense<0.000000e+00> : vector<16xf32>
    %9 = vector.multi_reduction <add>, %8, %cst_2 [1] : vector<16x32xf32> to vector<16xf32>
    %10 = vector.shape_cast %9 : vector<16xf32> to vector<16x1xf32>
    %cst_3 = arith.constant 3.200000e+01 : f32
    %11 = vector.broadcast %cst_3 : f32 to vector<16x1xf32>
    %12 = arith.divf %10, %11 : vector<16x1xf32>
    %13 = vector.broadcast %5 : vector<16x1xf32> to vector<16x32xf32>
    %14 = arith.subf %1, %13 : vector<16x32xf32>
    %cst_4 = arith.constant 9.99999996E-13 : f32
    %15 = vector.broadcast %cst_4 : f32 to vector<16x1xf32>
    %16 = arith.addf %12, %15 : vector<16x1xf32>
    %17 = math.rsqrt %16 : vector<16x1xf32>
    %18 = vector.broadcast %17 : vector<16x1xf32> to vector<16x32xf32>
    %19 = arith.mulf %14, %18 : vector<16x32xf32>
    %c0_5 = arith.constant 0 : index
    %c0_6 = arith.constant 0 : index
    %20 = vector.load %arg2[%c0_5, %c0_6] : memref<1x32xbf16, #tpu.memory_space<vmem>>, vector<1x32xbf16>
    %21 = arith.extf %20 : vector<1x32xbf16> to vector<1x32xf32>
    %22 = vector.broadcast %21 : vector<1x32xf32> to vector<16x32xf32>
    %23 = arith.mulf %19, %22 : vector<16x32xf32>
    %c0_7 = arith.constant 0 : index
    %c0_8 = arith.constant 0 : index
    %24 = vector.load %arg3[%c0_7, %c0_8] : memref<1x32xbf16, #tpu.memory_space<vmem>>, vector<1x32xbf16>
    %25 = arith.extf %24 : vector<1x32xbf16> to vector<1x32xf32>
    %26 = vector.broadcast %25 : vector<1x32xf32> to vector<16x32xf32>
    %27 = arith.addf %23, %26 : vector<16x32xf32>
    %28 = arith.truncf %27 : vector<16x32xf32> to vector<16x32xbf16>
    %c0_9 = arith.constant 0 : index
    %c0_10 = arith.constant 0 : index
    %29 = vector.load %arg4[%c0_9, %c0_10] : memref<16x32xbf16, #tpu.memory_space<vmem>>, vector<16x32xbf16>
    tpu.vector_store %arg4[%c0_9, %c0_10], %28 {strides = array<i32>} : memref<16x32xbf16, #tpu.memory_space<vmem>>, vector<16x32xbf16>,
    return
  }
  func.func @transform_0(%arg0: i32) -> (i32, i32) {
    %c0_i32 = arith.constant 0 : i32
    %c0_i32_0 = arith.constant 0 : i32
    return %arg0, %c0_i32 : i32, i32
  }
  func.func @transform_1(%arg0: i32) -> (i32, i32) {
    %c0_i32 = arith.constant 0 : i32
    %c0_i32_0 = arith.constant 0 : i32
    %c0_i32_1 = arith.constant 0 : i32
    return %c0_i32, %c0_i32_0 : i32, i32
  }
  func.func @transform_2(%arg0: i32) -> (i32, i32) {
    %c0_i32 = arith.constant 0 : i32
    %c0_i32_0 = arith.constant 0 : i32
    %c0_i32_1 = arith.constant 0 : i32
    return %c0_i32, %c0_i32_0 : i32, i32
  }
  func.func @transform_3(%arg0: i32) -> (i32, i32) {
    %c0_i32 = arith.constant 0 : i32
    %c0_i32_0 = arith.constant 0 : i32
    return %arg0, %c0_i32 : i32, i32
  }
}

</mosaic_0001>

<llo_original>
// kernel: tpu_custom_call.1
$region0: #{tpu_custom_call.1}
  #allocation0 [shape = 'u32[]', space=smem, size = 0x4, offset = 0x4, fixed_abs, tag = 'smem constant byte address 0x4 - core index']
  #allocation1 [shape = 'u32[144,128]{1,0:T(1,128)}', space=vmem, size = 0x12000, scoped, tag = 'internal scratch']
  %s0 = inlined_call_operand.hbm [shape: bf16[16,32], index: 0, kind: input, shape index: {}]
  %s1 = inlined_call_operand.vmem [shape: bf16[1,32], index: 1, kind: input, shape index: {}]
  %s2 = inlined_call_operand.vmem [shape: bf16[1,32], index: 2, kind: input, shape index: {}]
  %s3 = inlined_call_operand.hbm [shape: bf16[16,32], index: 3, kind: output, shape index: {}]
  %s4 = sld [smem:[#allocation0]]
  $region26: #{tpu_custom_call.1} parent=0
    _
  %s6 = ssub.s32 1, %s4
  %s7 = scalar_select 0, %s6, %s4
  $region1: #{tpu_custom_call.1} parent=0
    #allocation2 [shape = 'u8[4096]{0}', space=vmem, size = 0x1000, scoped, tag = 'input window, operand 0, single buffered']
    #allocation3 [shape = 's32[1]{0}', space=sflag, size = 0x4, scoped, tag = 'scoped memory for tpu_custom_call.1']
    #allocation4 [shape = 's32[1]{0}', space=sflag, size = 0x4, scoped, tag = 'scoped memory for tpu_custom_call.1']
    #allocation5 [shape = 'u8[4096]{0}', space=vmem, size = 0x1000, scoped, tag = 'output window, operand 0, single buffered']
    %8 = vsyncpa [#allocation3], 0
    %9 = vsyncpa [#allocation4], 0
    // Predicated region
    $region2: #{tpu_custom_call.1} parent=1 // pred_check
      _
    $region3: #{tpu_custom_call.1} parent=1 // pred_check_branch
      %11 = sbr.rel (0) target = $region5
    $region4: #{tpu_custom_call.1} parent=1 // pred_region
      %s13 = ssub.s32 128, 128
      %14 = vsyncadd [#allocation3], %s13
      %s15 = sshll.u32 [#allocation2], 4
      %s16 = int_to_ptr.vmem [resolvable:$true] %s15
      %21 = dma.hbm_to_vmem [thread:$0]  %s0, 128, %s16, [#allocation3], 64, 64, 4
    $region5: #{tpu_custom_call.1} parent=1 // pred_fallthru
      _
    // Predicated region
    $region6: #{tpu_custom_call.1} parent=1 // pred_check
      _
    $region7: #{tpu_custom_call.1} parent=1 // pred_check_branch
      %23 = sbr.rel (0) target = $region9
    $region8: #{tpu_custom_call.1} parent=1 // pred_region
      _
    $region9: #{tpu_custom_call.1} parent=1 // pred_fallthru
      _
    // Predicated region
    $region10: #{tpu_custom_call.1} parent=1 // pred_check
      _
    $region11: #{tpu_custom_call.1} parent=1 // pred_check_branch
      %25 = sbr.rel (0) target = $region13
    $region12: #{tpu_custom_call.1} parent=1 // pred_region
      _
    $region13: #{tpu_custom_call.1} parent=1 // pred_fallthru
      _
    // Predicated region
    $region14: #{tpu_custom_call.1} parent=1 // pred_check
      _
    $region15: #{tpu_custom_call.1} parent=1 // pred_check_branch
      %27 = sbr.rel (0) target = $region17
    $region16: #{tpu_custom_call.1} parent=1 // pred_region
      %28 = dma.done [#allocation3], 128
    $region17: #{tpu_custom_call.1} parent=1 // pred_fallthru
      _
    %v29 = vld [vmem:[#allocation2] sm:$0xf]
    %v30 = vld [vmem:[#allocation2 + $0x4] sm:$0xf]
    %v31 = vunpack.c.l.bf16 %v29
    %v32 = vunpack.c.l.bf16 %v30
    %vm33 = vcmask 261120
    %v34 = vsel %vm33, %v31, 0.0
    %35 = vadd.xlane.f32.xlu0 %v34
    %v36 = vpop.xlane.xlu0 %35
    %v37 = vsel %vm33, %v32, 0.0
    %38 = vadd.xlane.f32.xlu0 %v37
    %v39 = vpop.xlane.xlu0 %38
    %v40 = vrcp.pop 32.0
    %v41 = vmul.f32 %v36, %v40
    %v42 = vmul.f32 %v39, %v40
    %v43 = vsub.f32 %v31, %v41
    %v44 = vsub.f32 %v32, %v42
    %v45 = vmul.f32 %v43, %v43
    %v46 = vmul.f32 %v44, %v44
    %v47 = vsel %vm33, %v45, 0.0
    %48 = vadd.xlane.f32.xlu0 %v47
    %v49 = vpop.xlane.xlu0 %48
    %v50 = vsel %vm33, %v46, 0.0
    %51 = vadd.xlane.f32.xlu0 %v50
    %v52 = vpop.xlane.xlu0 %51
    %v53 = vmul.f32 %v49, %v40
    %v54 = vmul.f32 %v52, %v40
    %v55 = vadd.f32 %v53, 1e-12
    %v56 = vadd.f32 %v54, 1e-12
    %v57 = vrsqrt.pop %v55
    %v58 = vrsqrt.pop %v56
    %v59 = vmul.f32 %v43, %v57
    %v60 = vmul.f32 %v44, %v58
    %v61 = vld [vmem:[%s1] sm:$0x1]
    %v62 = vunpack.c.l.bf16 %v61
    %v63 = vlaneseq
    %v64 = vshrl.u32 %v63, 7
    %v65 = vsub.s32 0, %v64
    %v66 = vrot.slane %v62, %v65
    %v67 = vmul.f32 %v59, %v66
    %v68 = vmul.f32 %v60, %v66
    %v69 = vld [vmem:[%s2] sm:$0x1]
    %v70 = vunpack.c.l.bf16 %v69
    %v71 = vlaneseq
    %v72 = vshrl.u32 %v71, 7
    %v73 = vsub.s32 0, %v72
    %v74 = vrot.slane %v70, %v73
    %v75 = vadd.f32 %v67, %v74
    %v76 = vadd.f32 %v68, %v74
    %v77 = vpack.c.bf16 %v76, %v75
    %v79 = vunpack.c.l.b16 %v77
    %v80 = vunpack.c.h.b16 %v77
    %v81 = vpack.c.b16 %v79, %v79
    %v82 = vpack.c.b16 %v80, %v80
    %vm85 = vcmask 257024
    %86 = vst.msk [vmem:[#allocation5] sm:$0xf] %vm85, %v81
    %87 = vst.msk [vmem:[#allocation5 + $0x4] sm:$0xf] %vm85, %v82
    // Predicated region
    $region18: #{tpu_custom_call.1} parent=1 // pred_check
      _
    $region19: #{tpu_custom_call.1} parent=1 // pred_check_branch
      %89 = sbr.rel (0) target = $region21
    $region20: #{tpu_custom_call.1} parent=1 // pred_region
      %s91 = ssub.s32 128, 128
      %92 = vsyncadd [#allocation4], %s91
      %s93 = sshll.u32 [#allocation5], 4
      %s94 = int_to_ptr.vmem [resolvable:$true] %s93
      %99 = dma.vmem_to_hbm [thread:$0]  %s94, 128, %s3, [#allocation4], 64, 64, 4
    $region21: #{tpu_custom_call.1} parent=1 // pred_fallthru
      _
    // Predicated region
    $region22: #{tpu_custom_call.1} parent=1 // pred_check
      _
    $region23: #{tpu_custom_call.1} parent=1 // pred_check_branch
      %101 = sbr.rel (0) target = $region25
    $region24: #{tpu_custom_call.1} parent=1 // pred_region
      %102 = dma.done [#allocation4], 128
    $region25: #{tpu_custom_call.1} parent=1 // pred_fallthru
      _
    %103 = vsyncpa [#allocation3], 1
    %104 = vsyncpa [#allocation4], 1

</llo_original>
